<compile_context>
chip_gen: v5e
topology: v5e:2x2
jax: 0.10.0
libtpu: 0.0.40
codegen_flags: <defaults>
</compile_context>

<pallas_src>
import functools

import jax
import jax.numpy as jnp
from jax.experimental import pallas as pl
from jax.experimental.pallas import tpu as pltpu

BN_EPS = 1e-5
GN_EPS = 1e-5
_VMEM_LIMIT = 32 * 1024 * 1024  # safe on v5e/v6e/v7x; blocks below stay well under it


def _choose_m_tile(m, preferred=(2048, 1024, 512, 256, 128)):
    """Largest lane tile (multiple of 128) that divides m; fall back to one block."""
    for t in preferred:
        if t <= m and m % t == 0:
            return t
    return m


# ------------------------------------------------------------------------------------
# Pallas kernel 1a: 3x3 offset conv (bf16 matmul over M tiles) + BN stat accumulation
# ------------------------------------------------------------------------------------
def _offset_conv_stats_kernel(w_ref, p_ref, conv_ref, sum_ref, sq_ref):
    # w: [2K, C*9] bf16 (resident), p: [C*9, TM] bf16, conv out: [2K, TM] bf16
    conv = jnp.dot(w_ref[...], p_ref[...], preferred_element_type=jnp.float32)
    conv_ref[...] = conv.astype(conv_ref.dtype)

    @pl.when(pl.program_id(0) == 0)
    def _init():
        sum_ref[...] = jnp.zeros_like(sum_ref)
        sq_ref[...] = jnp.zeros_like(sq_ref)

    # f32 stats straight from the MXU result (before the bf16 downcast to HBM).
    sum_ref[...] += jnp.sum(conv, axis=1, keepdims=True)        # [2K, 1]
    sq_ref[...] += jnp.sum(conv * conv, axis=1, keepdims=True)  # [2K, 1]


# ------------------------------------------------------------------------------------
# Pallas kernel 1b: BatchNorm(batch stats, gamma=1, beta=0) + tanh, tiled over M
# ------------------------------------------------------------------------------------
def _bn_tanh_kernel(conv_ref, sum_ref, sq_ref, off_ref, *, inv_count):
    mean = sum_ref[...] * inv_count                              # [2K, 1]
    var = jnp.maximum(sq_ref[...] * inv_count - mean * mean, 0.0)
    scale = jax.lax.rsqrt(var + BN_EPS)                          # EUP
    shift = -mean * scale
    off_ref[...] = jnp.tanh(conv_ref[...].astype(jnp.float32) * scale + shift)


# ------------------------------------------------------------------------------------
# Pallas kernel 2: snake conv (bf16 matmul) + GroupNorm + ReLU, one sample per grid step
# ------------------------------------------------------------------------------------
def _snake_conv_gn_relu_kernel(d_ref, w_ref, b_ref, g_ref, out_ref, *, inv_gcount):
    # d: [1, K*C, WH] bf16; w: [O, K*C] bf16; b: [O, 1] f32;
    # g: [O, O] f32 group-membership (0/1); out: [1, O, WH] f32
    conv = jnp.dot(w_ref[...], d_ref[0], preferred_element_type=jnp.float32)  # [O, WH]
    conv = conv + b_ref[...]
    # Vectorized GroupNorm: pool within groups via a small [O,O] matmul (wide N),
    # then reduce over the lane (spatial) axis. O is tiny, so this is negligible work
    # and avoids any sublane-slice/concat relayouts.
    gsum = jnp.dot(g_ref[...], conv, preferred_element_type=jnp.float32)      # [O, WH]
    gsq = jnp.dot(g_ref[...], conv * conv, preferred_element_type=jnp.float32)
    gmean = jnp.sum(gsum, axis=1, keepdims=True) * inv_gcount                 # [O, 1]
    gex2 = jnp.sum(gsq, axis=1, keepdims=True) * inv_gcount
    gvar = jnp.maximum(gex2 - gmean * gmean, 0.0)
    out_ref[0] = jnp.maximum((conv - gmean) * jax.lax.rsqrt(gvar + GN_EPS), 0.0)


# ------------------------------------------------------------------------------------
# JAX glue (im2col, coordinate maps, gather + pre-summed bilinear weighting)
# ------------------------------------------------------------------------------------
def _im2col_3x3_T(f):
    # Transposed, lane-dense im2col: [C*9, B*W*H], row index = c*9 + kh*3 + kw.
    # TODO(synk): avoid this 9x HBM intermediate entirely by expressing the 3x3 conv
    # as 9 shifted-view matmuls over the padded feature map inside kernel 1.
    B, C, W, H = f.shape
    fp = jnp.pad(f, ((0, 0), (0, 0), (1, 1), (1, 1)))
    taps = [fp[:, :, kh:kh + W, kw:kw + H] for kh in range(3) for kw in range(3)]
    st = jnp.stack(taps, axis=2)                                 # [B, C, 9, W, H]
    return jnp.transpose(st, (1, 2, 0, 3, 4)).reshape(C * 9, B * W * H)


def _accumulate_offsets(off, K):
    # reproduces DSC._coordinate_map_3D's sequential accumulation loop exactly
    center = K // 2
    cols = [off[:, i] for i in range(K)]
    cols[center] = jnp.zeros_like(cols[center])
    for index in range(1, center):
        cols[center + index] = cols[center + index - 1] + off[:, center + index]
        cols[center - index] = cols[center - index + 1] + off[:, center - index]
    return jnp.stack(cols, axis=1)


def _coordinate_maps(offset, K, extend_scope, morph, if_offset, W, H):
    # offset: [B, 2K, W, H] (post BN + tanh)
    B = offset.shape[0]
    y_off, x_off = offset[:, :K], offset[:, K:]
    center = K // 2
    w_idx = jnp.arange(W, dtype=jnp.float32).reshape(1, 1, W, 1)
    h_idx = jnp.arange(H, dtype=jnp.float32).reshape(1, 1, 1, H)
    lin = jnp.linspace(-float(center), float(center), K).reshape(1, K, 1, 1)
    if morph == 0:
        y_new = jnp.broadcast_to(w_idx + jnp.zeros_like(lin), (B, K, W, H))
        x_new = jnp.broadcast_to(h_idx + lin, (B, K, W, H))
        if if_offset:
            y_new = y_new + extend_scope * _accumulate_offsets(y_off, K)
        # torch reshape -> [B, K*W, H], i.e. flatten order (b, w, k, h)
        y_flat = jnp.transpose(y_new, (0, 2, 1, 3)).reshape(-1)
        x_flat = jnp.transpose(x_new, (0, 2, 1, 3)).reshape(-1)
    else:
        y_new = jnp.broadcast_to(w_idx + lin, (B, K, W, H))
        x_new = jnp.broadcast_to(h_idx + jnp.zeros_like(lin), (B, K, W, H))
        if if_offset:
            x_new = x_new + extend_scope * _accumulate_offsets(x_off, K)
        # torch reshape -> [B, W, K*H], i.e. flatten order (b, w, h, k)
        y_flat = jnp.transpose(y_new, (0, 2, 3, 1)).reshape(-1)
        x_flat = jnp.transpose(x_new, (0, 2, 3, 1)).reshape(-1)
    return y_flat, x_flat


def _bilinear_deformed(f, y_flat, x_flat, K, morph):
    # TODO(synk): the 4-point gather itself stays in plain JAX (data-dependent
    # per-element gather); the 4-way weighting is pre-summed here so kernel 2
    # streams a single operand (4x less DMA than passing values + weights).
    B, C, W, H = f.shape
    max_y, max_x = W - 1, H - 1
    y0 = jnp.floor(y_flat).astype(jnp.int32)
    x0 = jnp.floor(x_flat).astype(jnp.int32)
    y1, x1 = y0 + 1, x0 + 1
    y0c, y1c = jnp.clip(y0, 0, max_y), jnp.clip(y1, 0, max_y)
    x0c, x1c = jnp.clip(x0, 0, max_x), jnp.clip(x1, 0, max_x)

    # NOTE: the reference's flat index (base_y - base + x) cancels the batch offset,
    # so every batch samples batch 0's feature map. Reproduced here on purpose.
    table = jnp.transpose(f[0], (1, 2, 0)).reshape(W * H, C)     # [W*H, C]
    va0 = table[y0c * H + x0c]
    vc0 = table[y0c * H + x1c]
    va1 = table[y1c * H + x0c]
    vc1 = table[y1c * H + x1c]

    y0w = jnp.clip(y0, 0, max_y + 1).astype(jnp.float32)
    y1w = jnp.clip(y1, 0, max_y + 1).astype(jnp.float32)
    x0w = jnp.clip(x0, 0, max_x + 1).astype(jnp.float32)
    x1w = jnp.clip(x1, 0, max_x + 1).astype(jnp.float32)
    wa0 = (y1w - y_flat) * (x1w - x_flat)
    wc0 = (y1w - y_flat) * (x_flat - x0w)
    wa1 = (y_flat - y0w) * (x1w - x_flat)
    wc1 = (y_flat - y0w) * (x_flat - x0w)

    deformed = (va0 * wa0[:, None] + vc0 * wc0[:, None]
                + va1 * wa1[:, None] + vc1 * wc1[:, None])       # [B*K*W*H, C]

    # Rearrange to [B, K*C, W*H] with contraction index k*C + c (snake conv layout).
    if morph == 0:
        d = deformed.reshape(B, W, K, H, C).transpose(0, 2, 4, 1, 3)   # [B,K,C,W,H]
    else:
        d = deformed.reshape(B, W, H, K, C).transpose(0, 3, 4, 1, 2)   # [B,K,C,W,H]
    return d.reshape(B, K * C, W * H)


# ------------------------------------------------------------------------------------
# Full DSConv forward
# ------------------------------------------------------------------------------------
def dsconv_forward(f, params, *, kernel_size, extend_scope, morph, if_offset):
    B, C, W, H = f.shape
    K = kernel_size
    M0 = B * W * H
    WH = W * H
    C9 = C * 9

    # --- offset branch: kernel 1a (conv + BN stats) and kernel 1b (normalize + tanh)
    patchesT = _im2col_3x3_T(f).astype(jnp.bfloat16)             # [C*9, M0], lane-dense
    wmat_off = params["w_off"].reshape(2 * K, C9).astype(jnp.bfloat16)
    # Conv bias dropped: training-mode BatchNorm (gamma=1, beta=0) cancels it exactly.
    TM = _choose_m_tile(M0)
    nmt = M0 // TM

    conv_off, off_sum, off_sq = pl.pallas_call(
        _offset_conv_stats_kernel,
        grid=(nmt,),
        in_specs=[
            pl.BlockSpec((2 * K, C9), lambda i: (0, 0)),
            pl.BlockSpec((C9, TM), lambda i: (0, i)),
        ],
        out_specs=(
            pl.BlockSpec((2 * K, TM), lambda i: (0, i)),
            pl.BlockSpec((2 * K, 1), lambda i: (0, 0)),
            pl.BlockSpec((2 * K, 1), lambda i: (0, 0)),
        ),
        out_shape=(
            jax.ShapeDtypeStruct((2 * K, M0), jnp.bfloat16),
            jax.ShapeDtypeStruct((2 * K, 1), jnp.float32),
            jax.ShapeDtypeStruct((2 * K, 1), jnp.float32),
        ),
        compiler_params=pltpu.CompilerParams(
            dimension_semantics=("arbitrary",),
            vmem_limit_bytes=_VMEM_LIMIT),
    )(wmat_off, patchesT)

    off_flat = pl.pallas_call(
        functools.partial(_bn_tanh_kernel, inv_count=1.0 / float(M0)),
        grid=(nmt,),
        in_specs=[
            pl.BlockSpec((2 * K, TM), lambda i: (0, i)),
            pl.BlockSpec((2 * K, 1), lambda i: (0, 0)),
            pl.BlockSpec((2 * K, 1), lambda i: (0, 0)),
        ],
        out_specs=pl.BlockSpec((2 * K, TM), lambda i: (0, i)),
        out_shape=jax.ShapeDtypeStruct((2 * K, M0), jnp.float32),
        compiler_params=pltpu.CompilerParams(
            dimension_semantics=("parallel",),
            vmem_limit_bytes=_VMEM_LIMIT),
    )(conv_off, off_sum, off_sq)

    offset = jnp.transpose(off_flat.reshape(2 * K, B, W, H), (1, 0, 2, 3))  # [B, 2K, W, H]

    # --- snake coordinates + bilinear gather + pre-summed weighting (JAX glue)
    y_flat, x_flat = _coordinate_maps(offset, K, extend_scope, morph, if_offset, W, H)
    d_arr = _bilinear_deformed(f, y_flat, x_flat, K, morph).astype(jnp.bfloat16)  # [B,K*C,WH]

    # --- snake conv + GroupNorm + ReLU (Pallas kernel 2, grid over batch)
    if morph == 0:
        w_dsc, b_dsc = params["w_x"][:, :, :, 0], params["b_x"]  # [O, C, K], [O]
    else:
        w_dsc, b_dsc = params["w_y"][:, :, 0, :], params["b_y"]
    O = w_dsc.shape[0]
    assert O % 4 == 0, "GroupNorm(out_ch // 4, out_ch) requires out_ch % 4 == 0"
    groups = O // 4
    gsize = O // groups
    wT = jnp.transpose(w_dsc, (0, 2, 1)).reshape(O, K * C).astype(jnp.bfloat16)  # [O, K*C]
    bias = b_dsc.reshape(O, 1).astype(jnp.float32)
    ch = jnp.arange(O)
    gmat = ((ch[:, None] // gsize) == (ch[None, :] // gsize)).astype(jnp.float32)  # [O, O]

    out = pl.pallas_call(
        functools.partial(_snake_conv_gn_relu_kernel,
                          inv_gcount=1.0 / float(gsize * WH)),
        grid=(B,),
        in_specs=[
            pl.BlockSpec((1, K * C, WH), lambda b: (b, 0, 0)),
            pl.BlockSpec((O, K * C), lambda b: (0, 0)),
            pl.BlockSpec((O, 1), lambda b: (0, 0)),
            pl.BlockSpec((O, O), lambda b: (0, 0)),
        ],
        out_specs=pl.BlockSpec((1, O, WH), lambda b: (b, 0, 0)),
        out_shape=jax.ShapeDtypeStruct((B, O, WH), jnp.float32),
        compiler_params=pltpu.CompilerParams(
            dimension_semantics=("parallel",),
            vmem_limit_bytes=_VMEM_LIMIT),
    )(d_arr, wT, bias, gmat)

    return out.reshape(B, O, W, H)                               # [B, O, W, H]


if __name__ == "__main__":
    B, C, W, H = 2, 4, 16, 16
    K = 3
    out_ch = 8

    key = jax.random.PRNGKey(0)
    ks = jax.random.split(key, 7)
    params = {
        "w_off": 0.1 * jax.random.normal(ks[0], (2 * K, C, 3, 3), jnp.float32),
        "b_off": 0.05 * jax.random.normal(ks[1], (2 * K,), jnp.float32),  # cancelled by BN
        "w_x": 0.1 * jax.random.normal(ks[2], (out_ch, C, K, 1), jnp.float32),
        "b_x": 0.05 * jax.random.normal(ks[3], (out_ch,), jnp.float32),
        "w_y": 0.1 * jax.random.normal(ks[4], (out_ch, C, 1, K), jnp.float32),
        "b_y": 0.05 * jax.random.normal(ks[5], (out_ch,), jnp.float32),
    }
    f = jax.random.normal(ks[6], (B, C, W, H), jnp.float32)

    for morph in (0, 1):
        fwd = jax.jit(functools.partial(dsconv_forward, kernel_size=K,
                                        extend_scope=1.0, morph=morph, if_offset=True))
        out = jax.block_until_ready(fwd(f, params))
        assert out.shape == (B, out_ch, W, H), out.shape
        assert bool(jnp.all(jnp.isfinite(out)))
        assert bool(jnp.all(out >= 0.0))  # ReLU output

    print("KERNEL_OK")
</pallas_src>

<mosaic_0001>
module attributes {stable_mosaic.version = 11 : i64} {
  func.func @_bn_tanh_kernel(%arg0: i32, %arg1: memref<6x512xbf16, #tpu.memory_space<vmem>>, %arg2: memref<6x1xf32, #tpu.memory_space<vmem>>, %arg3: memref<6x1xf32, #tpu.memory_space<vmem>>, %arg4: memref<6x512xf32, #tpu.memory_space<vmem>>) attributes {dimension_semantics = [#tpu.dimension_semantics<parallel>], iteration_bounds = array<i64: 1>, scalar_prefetch = 0 : i64, scratch_operands = 0 : i64, tpu.core_type = #tpu.core_type<tc>, window_params = [{transform_indices = @transform_0, window_bounds = array<i64: 6, 512>}, {pipeline_mode = #tpu.pipeline_mode<synchronous>, transform_indices = @transform_1, window_bounds = array<i64: 6, 1>}, {pipeline_mode = #tpu.pipeline_mode<synchronous>, transform_indices = @transform_2, window_bounds = array<i64: 6, 1>}, {transform_indices = @transform_3, window_bounds = array<i64: 6, 512>}]} {
    %c0 = arith.constant 0 : index
    %c0_0 = arith.constant 0 : index
    %0 = vector.load %arg2[%c0, %c0_0] : memref<6x1xf32, #tpu.memory_space<vmem>>, vector<6x1xf32>
    %cst = arith.constant 0.001953125 : f32
    %1 = vector.broadcast %cst : f32 to vector<6x1xf32>
    %2 = arith.mulf %0, %1 : vector<6x1xf32>
    %c0_1 = arith.constant 0 : index
    %c0_2 = arith.constant 0 : index
    %3 = vector.load %arg3[%c0_1, %c0_2] : memref<6x1xf32, #tpu.memory_space<vmem>>, vector<6x1xf32>
    %cst_3 = arith.constant 0.001953125 : f32
    %4 = vector.broadcast %cst_3 : f32 to vector<6x1xf32>
    %5 = arith.mulf %3, %4 : vector<6x1xf32>
    %6 = arith.mulf %2, %2 : vector<6x1xf32>
    %7 = arith.subf %5, %6 : vector<6x1xf32>
    %cst_4 = arith.constant 0.000000e+00 : f32
    %8 = vector.broadcast %cst_4 : f32 to vector<6x1xf32>
    %9 = arith.maximumf %7, %8 : vector<6x1xf32>
    %cst_5 = arith.constant 9.99999974E-6 : f32
    %10 = vector.broadcast %cst_5 : f32 to vector<6x1xf32>
    %11 = arith.addf %9, %10 : vector<6x1xf32>
    %12 = math.rsqrt %11 : vector<6x1xf32>
    %cst_6 = arith.constant 0.000000e+00 : f32
    %13 = vector.broadcast %cst_6 : f32 to vector<6x1xf32>
    %14 = arith.subf %13, %2 : vector<6x1xf32>
    %15 = arith.mulf %14, %12 : vector<6x1xf32>
    %c0_7 = arith.constant 0 : index
    %c0_8 = arith.constant 0 : index
    %16 = vector.load %arg1[%c0_7, %c0_8] : memref<6x512xbf16, #tpu.memory_space<vmem>>, vector<6x512xbf16>
    %17 = arith.extf %16 : vector<6x512xbf16> to vector<6x512xf32>
    %18 = vector.broadcast %12 : vector<6x1xf32> to vector<6x512xf32>
    %19 = arith.mulf %17, %18 : vector<6x512xf32>
    %20 = vector.broadcast %15 : vector<6x1xf32> to vector<6x512xf32>
    %21 = arith.addf %19, %20 : vector<6x512xf32>
    %22 = math.tanh %21 : vector<6x512xf32>
    %c0_9 = arith.constant 0 : index
    %c0_10 = arith.constant 0 : index
    %23 = vector.load %arg4[%c0_9, %c0_10] : memref<6x512xf32, #tpu.memory_space<vmem>>, vector<6x512xf32>
    tpu.vector_store %arg4[%c0_9, %c0_10], %22 {strides = array<i32>} : memref<6x512xf32, #tpu.memory_space<vmem>>, vector<6x512xf32>,
    return
  }
  func.func @transform_0(%arg0: i32) -> (i32, i32) {
    %c0_i32 = arith.constant 0 : i32
    %c0_i32_0 = arith.constant 0 : i32
    return %c0_i32, %arg0 : i32, i32
  }
  func.func @transform_1(%arg0: i32) -> (i32, i32) {
    %c0_i32 = arith.constant 0 : i32
    %c0_i32_0 = arith.constant 0 : i32
    %c0_i32_1 = arith.constant 0 : i32
    return %c0_i32, %c0_i32_0 : i32, i32
  }
  func.func @transform_2(%arg0: i32) -> (i32, i32) {
    %c0_i32 = arith.constant 0 : i32
    %c0_i32_0 = arith.constant 0 : i32
    %c0_i32_1 = arith.constant 0 : i32
    return %c0_i32, %c0_i32_0 : i32, i32
  }
  func.func @transform_3(%arg0: i32) -> (i32, i32) {
    %c0_i32 = arith.constant 0 : i32
    %c0_i32_0 = arith.constant 0 : i32
    return %c0_i32, %arg0 : i32, i32
  }
}

module attributes {stable_mosaic.version = 11 : i64} {
  func.func @_offset_conv_stats_kernel(%arg0: i32, %arg1: memref<6x36xbf16, #tpu.memory_space<vmem>>, %arg2: memref<36x512xbf16, #tpu.memory_space<vmem>>, %arg3: memref<6x512xbf16, #tpu.memory_space<vmem>>, %arg4: memref<6x1xf32, #tpu.memory_space<vmem>>, %arg5: memref<6x1xf32, #tpu.memory_space<vmem>>) attributes {dimension_semantics = [#tpu.dimension_semantics<arbitrary>], iteration_bounds = array<i64: 1>, scalar_prefetch = 0 : i64, scratch_operands = 0 : i64, tpu.core_type = #tpu.core_type<tc>, window_params = [{pipeline_mode = #tpu.pipeline_mode<synchronous>, transform_indices = @transform_0, window_bounds = array<i64: 6, 36>}, {transform_indices = @transform_1, window_bounds = array<i64: 36, 512>}, {transform_indices = @transform_2, window_bounds = array<i64: 6, 512>}, {pipeline_mode = #tpu.pipeline_mode<synchronous>, transform_indices = @transform_3, window_bounds = array<i64: 6, 1>}, {pipeline_mode = #tpu.pipeline_mode<synchronous>, transform_indices = @transform_4, window_bounds = array<i64: 6, 1>}]} {
    %c0 = arith.constant 0 : index
    %c0_0 = arith.constant 0 : index
    %0 = vector.load %arg1[%c0, %c0_0] : memref<6x36xbf16, #tpu.memory_space<vmem>>, vector<6x36xbf16>
    %c0_1 = arith.constant 0 : index
    %c0_2 = arith.constant 0 : index
    %1 = vector.load %arg2[%c0_1, %c0_2] : memref<36x512xbf16, #tpu.memory_space<vmem>>, vector<36x512xbf16>
    %cst = arith.constant dense<0.000000e+00> : vector<6x512xf32>
    %2 = tpu.matmul %0, %1, %cst {dimension_numbers = #tpu.dot_dimension_numbers<[1], [0], [0], [1], [0, 0, 1, 1], [], []>} : vector<6x36xbf16>, vector<36x512xbf16>, vector<6x512xf32> -> vector<6x512xf32>
    %3 = arith.truncf %2 : vector<6x512xf32> to vector<6x512xbf16>
    %c0_3 = arith.constant 0 : index
    %c0_4 = arith.constant 0 : index
    %4 = vector.load %arg3[%c0_3, %c0_4] : memref<6x512xbf16, #tpu.memory_space<vmem>>, vector<6x512xbf16>
    tpu.vector_store %arg3[%c0_3, %c0_4], %3 {strides = array<i32>} : memref<6x512xbf16, #tpu.memory_space<vmem>>, vector<6x512xbf16>,
    %c0_i32 = arith.constant 0 : i32
    %5 = arith.cmpi eq, %arg0, %c0_i32 : i32
    %6 = arith.extui %5 : i1 to i32
    %c0_i32_5 = arith.constant 0 : i32
    %7 = arith.cmpi ne, %6, %c0_i32_5 : i32
    scf.if %7 {
      %cst_16 = arith.constant 0.000000e+00 : f32
      %19 = vector.broadcast %cst_16 : f32 to vector<6x1xf32>
      %c0_17 = arith.constant 0 : index
      %c0_18 = arith.constant 0 : index
      %20 = vector.load %arg4[%c0_17, %c0_18] : memref<6x1xf32, #tpu.memory_space<vmem>>, vector<6x1xf32>
      tpu.vector_store %arg4[%c0_17, %c0_18], %19 {strides = array<i32>} : memref<6x1xf32, #tpu.memory_space<vmem>>, vector<6x1xf32>,
      %cst_19 = arith.constant 0.000000e+00 : f32
      %21 = vector.broadcast %cst_19 : f32 to vector<6x1xf32>
      %c0_20 = arith.constant 0 : index
      %c0_21 = arith.constant 0 : index
      %22 = vector.load %arg5[%c0_20, %c0_21] : memref<6x1xf32, #tpu.memory_space<vmem>>, vector<6x1xf32>
      tpu.vector_store %arg5[%c0_20, %c0_21], %21 {strides = array<i32>} : memref<6x1xf32, #tpu.memory_space<vmem>>, vector<6x1xf32>,
    } else {
    }
    %c0_6 = arith.constant 0 : index
    %c0_7 = arith.constant 0 : index
    %8 = vector.load %arg4[%c0_6, %c0_7] : memref<6x1xf32, #tpu.memory_space<vmem>>, vector<6x1xf32>
    %cst_8 = arith.constant dense<0.000000e+00> : vector<6xf32>
    %9 = vector.multi_reduction <add>, %2, %cst_8 [1] : vector<6x512xf32> to vector<6xf32>
    %10 = vector.shape_cast %9 : vector<6xf32> to vector<6x1xf32>
    %11 = arith.addf %8, %10 : vector<6x1xf32>
    %c0_9 = arith.constant 0 : index
    %c0_10 = arith.constant 0 : index
    %12 = vector.load %arg4[%c0_9, %c0_10] : memref<6x1xf32, #tpu.memory_space<vmem>>, vector<6x1xf32>
    tpu.vector_store %arg4[%c0_9, %c0_10], %11 {strides = array<i32>} : memref<6x1xf32, #tpu.memory_space<vmem>>, vector<6x1xf32>,
    %c0_11 = arith.constant 0 : index
    %c0_12 = arith.constant 0 : index
    %13 = vector.load %arg5[%c0_11, %c0_12] : memref<6x1xf32, #tpu.memory_space<vmem>>, vector<6x1xf32>
    %14 = arith.mulf %2, %2 : vector<6x512xf32>
    %cst_13 = arith.constant dense<0.000000e+00> : vector<6xf32>
    %15 = vector.multi_reduction <add>, %14, %cst_13 [1] : vector<6x512xf32> to vector<6xf32>
    %16 = vector.shape_cast %15 : vector<6xf32> to vector<6x1xf32>
    %17 = arith.addf %13, %16 : vector<6x1xf32>
    %c0_14 = arith.constant 0 : index
    %c0_15 = arith.constant 0 : index
    %18 = vector.load %arg5[%c0_14, %c0_15] : memref<6x1xf32, #tpu.memory_space<vmem>>, vector<6x1xf32>
    tpu.vector_store %arg5[%c0_14, %c0_15], %17 {strides = array<i32>} : memref<6x1xf32, #tpu.memory_space<vmem>>, vector<6x1xf32>,
    return
  }
  func.func @transform_0(%arg0: i32) -> (i32, i32) {
    %c0_i32 = arith.constant 0 : i32
    %c0_i32_0 = arith.constant 0 : i32
    %c0_i32_1 = arith.constant 0 : i32
    return %c0_i32, %c0_i32_0 : i32, i32
  }
  func.func @transform_1(%arg0: i32) -> (i32, i32) {
    %c0_i32 = arith.constant 0 : i32
    %c0_i32_0 = arith.constant 0 : i32
    return %c0_i32, %arg0 : i32, i32
  }
  func.func @transform_2(%arg0: i32) -> (i32, i32) {
    %c0_i32 = arith.constant 0 : i32
    %c0_i32_0 = arith.constant 0 : i32
    return %c0_i32, %arg0 : i32, i32
  }
  func.func @transform_3(%arg0: i32) -> (i32, i32) {
    %c0_i32 = arith.constant 0 : i32
    %c0_i32_0 = arith.constant 0 : i32
    %c0_i32_1 = arith.constant 0 : i32
    return %c0_i32, %c0_i32_0 : i32, i32
  }
  func.func @transform_4(%arg0: i32) -> (i32, i32) {
    %c0_i32 = arith.constant 0 : i32
    %c0_i32_0 = arith.constant 0 : i32
    %c0_i32_1 = arith.constant 0 : i32
    return %c0_i32, %c0_i32_0 : i32, i32
  }
}

module attributes {stable_mosaic.version = 11 : i64} {
  func.func @_snake_conv_gn_relu_kernel(%arg0: i32, %arg1: memref<1x12x256xbf16, #tpu.memory_space<vmem>>, %arg2: memref<8x12xbf16, #tpu.memory_space<vmem>>, %arg3: memref<8x1xf32, #tpu.memory_space<vmem>>, %arg4: memref<8x8xf32, #tpu.memory_space<vmem>>, %arg5: memref<1x8x256xf32, #tpu.memory_space<vmem>>) attributes {dimension_semantics = [#tpu.dimension_semantics<parallel>], iteration_bounds = array<i64: 2>, scalar_prefetch = 0 : i64, scratch_operands = 0 : i64, tpu.core_type = #tpu.core_type<tc>, window_params = [{transform_indices = @transform_0, window_bounds = array<i64: 1, 12, 256>}, {pipeline_mode = #tpu.pipeline_mode<synchronous>, transform_indices = @transform_1, window_bounds = array<i64: 8, 12>}, {pipeline_mode = #tpu.pipeline_mode<synchronous>, transform_indices = @transform_2, window_bounds = array<i64: 8, 1>}, {pipeline_mode = #tpu.pipeline_mode<synchronous>, transform_indices = @transform_3, window_bounds = array<i64: 8, 8>}, {transform_indices = @transform_4, window_bounds = array<i64: 1, 8, 256>}]} {
    %c0 = arith.constant 0 : index
    %c0_0 = arith.constant 0 : index
    %0 = vector.load %arg2[%c0, %c0_0] : memref<8x12xbf16, #tpu.memory_space<vmem>>, vector<8x12xbf16>
    %c0_1 = arith.constant 0 : index
    %c0_2 = arith.constant 0 : index
    %c0_3 = arith.constant 0 : index
    %1 = vector.load %arg1[%c0_1, %c0_2, %c0_3] : memref<1x12x256xbf16, #tpu.memory_space<vmem>>, vector<1x12x256xbf16>
    %2 = vector.shape_cast %1 : vector<1x12x256xbf16> to vector<12x256xbf16>
    %cst = arith.constant dense<0.000000e+00> : vector<8x256xf32>
    %3 = tpu.matmul %0, %2, %cst {dimension_numbers = #tpu.dot_dimension_numbers<[1], [0], [0], [1], [0, 0, 1, 1], [], []>} : vector<8x12xbf16>, vector<12x256xbf16>, vector<8x256xf32> -> vector<8x256xf32>
    %c0_4 = arith.constant 0 : index
    %c0_5 = arith.constant 0 : index
    %4 = vector.load %arg3[%c0_4, %c0_5] : memref<8x1xf32, #tpu.memory_space<vmem>>, vector<8x1xf32>
    %5 = vector.broadcast %4 : vector<8x1xf32> to vector<8x256xf32>
    %6 = arith.addf %3, %5 : vector<8x256xf32>
    %c0_6 = arith.constant 0 : index
    %c0_7 = arith.constant 0 : index
    %7 = vector.load %arg4[%c0_6, %c0_7] : memref<8x8xf32, #tpu.memory_space<vmem>>, vector<8x8xf32>
    %cst_8 = arith.constant dense<0.000000e+00> : vector<8x256xf32>
    %8 = tpu.matmul %7, %6, %cst_8 {dimension_numbers = #tpu.dot_dimension_numbers<[1], [0], [0], [1], [0, 0, 1, 1], [], []>} : vector<8x8xf32>, vector<8x256xf32>, vector<8x256xf32> -> vector<8x256xf32>
    %c0_9 = arith.constant 0 : index
    %c0_10 = arith.constant 0 : index
    %9 = vector.load %arg4[%c0_9, %c0_10] : memref<8x8xf32, #tpu.memory_space<vmem>>, vector<8x8xf32>
    %10 = arith.mulf %6, %6 : vector<8x256xf32>
    %cst_11 = arith.constant dense<0.000000e+00> : vector<8x256xf32>
    %11 = tpu.matmul %9, %10, %cst_11 {dimension_numbers = #tpu.dot_dimension_numbers<[1], [0], [0], [1], [0, 0, 1, 1], [], []>} : vector<8x8xf32>, vector<8x256xf32>, vector<8x256xf32> -> vector<8x256xf32>
    %cst_12 = arith.constant dense<0.000000e+00> : vector<8xf32>
    %12 = vector.multi_reduction <add>, %8, %cst_12 [1] : vector<8x256xf32> to vector<8xf32>
    %13 = vector.shape_cast %12 : vector<8xf32> to vector<8x1xf32>
    %cst_13 = arith.constant 9.765625E-4 : f32
    %14 = vector.broadcast %cst_13 : f32 to vector<8x1xf32>
    %15 = arith.mulf %13, %14 : vector<8x1xf32>
    %cst_14 = arith.constant dense<0.000000e+00> : vector<8xf32>
    %16 = vector.multi_reduction <add>, %11, %cst_14 [1] : vector<8x256xf32> to vector<8xf32>
    %17 = vector.shape_cast %16 : vector<8xf32> to vector<8x1xf32>
    %cst_15 = arith.constant 9.765625E-4 : f32
    %18 = vector.broadcast %cst_15 : f32 to vector<8x1xf32>
    %19 = arith.mulf %17, %18 : vector<8x1xf32>
    %20 = arith.mulf %15, %15 : vector<8x1xf32>
    %21 = arith.subf %19, %20 : vector<8x1xf32>
    %cst_16 = arith.constant 0.000000e+00 : f32
    %22 = vector.broadcast %cst_16 : f32 to vector<8x1xf32>
    %23 = arith.maximumf %21, %22 : vector<8x1xf32>
    %24 = vector.broadcast %15 : vector<8x1xf32> to vector<8x256xf32>
    %25 = arith.subf %6, %24 : vector<8x256xf32>
    %cst_17 = arith.constant 9.99999974E-6 : f32
    %26 = vector.broadcast %cst_17 : f32 to vector<8x1xf32>
    %27 = arith.addf %23, %26 : vector<8x1xf32>
    %28 = math.rsqrt %27 : vector<8x1xf32>
    %29 = vector.broadcast %28 : vector<8x1xf32> to vector<8x256xf32>
    %30 = arith.mulf %25, %29 : vector<8x256xf32>
    %cst_18 = arith.constant 0.000000e+00 : f32
    %31 = vector.broadcast %cst_18 : f32 to vector<8x256xf32>
    %32 = arith.maximumf %30, %31 : vector<8x256xf32>
    %c0_19 = arith.constant 0 : index
    %c0_20 = arith.constant 0 : index
    %c0_21 = arith.constant 0 : index
    %33 = vector.load %arg5[%c0_19, %c0_20, %c0_21] : memref<1x8x256xf32, #tpu.memory_space<vmem>>, vector<1x8x256xf32>
    %34 = vector.shape_cast %33 : vector<1x8x256xf32> to vector<8x256xf32>
    %35 = vector.shape_cast %32 : vector<8x256xf32> to vector<1x8x256xf32>
    tpu.vector_store %arg5[%c0_19, %c0_20, %c0_21], %35 {strides = array<i32>} : memref<1x8x256xf32, #tpu.memory_space<vmem>>, vector<1x8x256xf32>,
    return
  }
  func.func @transform_0(%arg0: i32) -> (i32, i32, i32) {
    %c0_i32 = arith.constant 0 : i32
    %c0_i32_0 = arith.constant 0 : i32
    %c0_i32_1 = arith.constant 0 : i32
    return %arg0, %c0_i32, %c0_i32_0 : i32, i32, i32
  }
  func.func @transform_1(%arg0: i32) -> (i32, i32) {
    %c0_i32 = arith.constant 0 : i32
    %c0_i32_0 = arith.constant 0 : i32
    %c0_i32_1 = arith.constant 0 : i32
    return %c0_i32, %c0_i32_0 : i32, i32
  }
  func.func @transform_2(%arg0: i32) -> (i32, i32) {
    %c0_i32 = arith.constant 0 : i32
    %c0_i32_0 = arith.constant 0 : i32
    %c0_i32_1 = arith.constant 0 : i32
    return %c0_i32, %c0_i32_0 : i32, i32
  }
  func.func @transform_3(%arg0: i32) -> (i32, i32) {
    %c0_i32 = arith.constant 0 : i32
    %c0_i32_0 = arith.constant 0 : i32
    %c0_i32_1 = arith.constant 0 : i32
    return %c0_i32, %c0_i32_0 : i32, i32
  }
  func.func @transform_4(%arg0: i32) -> (i32, i32, i32) {
    %c0_i32 = arith.constant 0 : i32
    %c0_i32_0 = arith.constant 0 : i32
    %c0_i32_1 = arith.constant 0 : i32
    return %arg0, %c0_i32, %c0_i32_0 : i32, i32, i32
  }
}

</mosaic_0001>

<llo_original>
// kernel: dsconv_forward.4
$region0: #{dsconv_forward.4}
  #allocation0 [shape = 'u32[]', space=smem, size = 0x4, offset = 0x4, fixed_abs, tag = 'smem constant byte address 0x4 - core index']
  #allocation1 [shape = 'u32[72,128]{1,0:T(1,128)}', space=vmem, size = 0x9000, scoped, tag = 'internal scratch']
  %s0 = inlined_call_operand.vmem [shape: bf16[6,512], index: 0, kind: input, shape index: {}]
  %s1 = inlined_call_operand.vmem [shape: f32[6,1], index: 1, kind: input, shape index: {}]
  %s2 = inlined_call_operand.vmem [shape: f32[6,1], index: 2, kind: input, shape index: {}]
  %s3 = inlined_call_operand.vmem [shape: f32[6,512], index: 3, kind: output, shape index: {}]
  %s4 = sld [smem:[#allocation0]]
  $region22: #{dsconv_forward.4} parent=0
    _
  %s6 = ssub.s32 1, %s4
  %s7 = scalar_select 0, %s6, %s4
  // Predicated region
  $region2: #{dsconv_forward.4} parent=0 // pred_check
    _
  $region3: #{dsconv_forward.4} parent=0 // pred_check_branch
    %9 = sbr.rel (0) target = $region5
  $region4: #{dsconv_forward.4} parent=0 // pred_region
    _
  $region5: #{dsconv_forward.4} parent=0 // pred_fallthru
    _
  // Predicated region
  $region6: #{dsconv_forward.4} parent=0 // pred_check
    _
  $region7: #{dsconv_forward.4} parent=0 // pred_check_branch
    %11 = sbr.rel (0) target = $region9
  $region8: #{dsconv_forward.4} parent=0 // pred_region
    _
  $region9: #{dsconv_forward.4} parent=0 // pred_fallthru
    _
  // Predicated region
  $region10: #{dsconv_forward.4} parent=0 // pred_check
    _
  $region11: #{dsconv_forward.4} parent=0 // pred_check_branch
    %13 = sbr.rel (0) target = $region13
  $region12: #{dsconv_forward.4} parent=0 // pred_region
    _
  $region13: #{dsconv_forward.4} parent=0 // pred_fallthru
    _
  %v14 = vld [vmem:[%s1] sm:$0x3f]
  %v15 = vmul.f32 %v14, 0.001953125
  %v16 = vld [vmem:[%s2] sm:$0x3f]
  %v17 = vmul.f32 %v16, 0.001953125
  %v18 = vmul.f32 %v15, %v15
  %v19 = vsub.f32 %v17, %v18
  %v20 = vmax.f32 %v19, 0.0
  %v21 = vadd.f32 %v20, 1e-05
  %v22 = vrsqrt.pop %v21
  %v23 = vmul.f32 %v22, %v21
  %v24 = vmul.f32 %v23, %v22
  %v25 = vmul.f32 0.5, %v24
  %v26 = vsub.f32 1.5, %v25
  %v27 = vmul.f32 %v22, %v26
  %vm28 = vweird.f32 %v21
  %vm29 = vweird.f32 %v22
  %vm30 = vmor %vm28, %vm29
  %v31 = vsel %vm30, %v22, %v27
  %v32 = vsub.f32 0.0, %v15
  %v33 = vmul.f32 %v32, %v31
  %v34 = vld [vmem:[%s0] sm:$0x77]
  %v35 = vld [vmem:[%s0 + $0x8] sm:$0x77]
  %v36 = vunpack.c.l.bf16 %v34
  %v37 = vunpack.c.h.bf16 %v34
  %v38 = vunpack.c.l.bf16 %v35
  %v39 = vunpack.c.h.bf16 %v35
  %41 = vset.pattern.permute.xlu0 0
  %42 = vperm.xlu0 %41, %v31
  %v43 = vpop.permute.xlu0 %42
  %v45 = vmul.f32 %v36, %v43
  %v46 = vmul.f32 %v37, %v43
  %v47 = vmul.f32 %v38, %v43
  %v48 = vmul.f32 %v39, %v43
  %50 = vset.pattern.permute.xlu0 0
  %51 = vperm.xlu0 %50, %v33
  %v52 = vpop.permute.xlu0 %51
  %v54 = vadd.f32 %v45, %v52
  %v55 = vadd.f32 %v46, %v52
  %v56 = vadd.f32 %v47, %v52
  %v57 = vadd.f32 %v48, %v52
  %v58 = vtanh.pop %v54
  %v59 = vtanh.pop %v55
  %v60 = vtanh.pop %v56
  %v61 = vtanh.pop %v57
  %62 = vst [vmem:[%s3] sm:$0x3f] %v58
  %63 = vst [vmem:[%s3 + $0x8] sm:$0x3f] %v59
  %64 = vst [vmem:[%s3 + $0x10] sm:$0x3f] %v60
  %65 = vst [vmem:[%s3 + $0x18] sm:$0x3f] %v61
  // Predicated region
  $region14: #{dsconv_forward.4} parent=0 // pred_check
    _
  $region15: #{dsconv_forward.4} parent=0 // pred_check_branch
    %67 = sbr.rel (0) target = $region17
  $region16: #{dsconv_forward.4} parent=0 // pred_region
    _
  $region17: #{dsconv_forward.4} parent=0 // pred_fallthru
    _
  // Predicated region
  $region18: #{dsconv_forward.4} parent=0 // pred_check
    _
  $region19: #{dsconv_forward.4} parent=0 // pred_check_branch
    %69 = sbr.rel (0) target = $region21
  $region20: #{dsconv_forward.4} parent=0 // pred_region
    _
  $region21: #{dsconv_forward.4} parent=0 // pred_fallthru
    _

// kernel: dsconv_forward.3
$region0: #{dsconv_forward.3}
  #allocation0 [shape = 'u32[]', space=smem, size = 0x4, offset = 0x4, fixed_abs, tag = 'smem constant byte address 0x4 - core index']
  #allocation1 [shape = 'u32[72,128]{1,0:T(1,128)}', space=vmem, size = 0x9000, scoped, tag = 'internal scratch']
  %s0 = inlined_call_operand.vmem [shape: bf16[6,36], index: 0, kind: input, shape index: {}]
  %s1 = inlined_call_operand.vmem [shape: bf16[36,512], index: 1, kind: input, shape index: {}]
  %s2 = inlined_call_operand.vmem [shape: bf16[6,512], index: 2, kind: output, shape index: {0}]
  %s3 = inlined_call_operand.vmem [shape: f32[6,1], index: 3, kind: output, shape index: {1}]
  %s4 = inlined_call_operand.vmem [shape: f32[6,1], index: 4, kind: output, shape index: {2}]
  %5 = xla_tuple %s2, %s3, %s4
  %s6 = sld [smem:[#allocation0]]
  $region38: #{dsconv_forward.3} parent=0
    _
  %s8 = ssub.s32 1, %s6
  %s9 = scalar_select 0, %s8, %s6
  // Predicated region
  $region2: #{dsconv_forward.3} parent=0 // pred_check
    _
  $region3: #{dsconv_forward.3} parent=0 // pred_check_branch
    %11 = sbr.rel (0) target = $region5
  $region4: #{dsconv_forward.3} parent=0 // pred_region
    _
  $region5: #{dsconv_forward.3} parent=0 // pred_fallthru
    _
  // Predicated region
  $region6: #{dsconv_forward.3} parent=0 // pred_check
    _
  $region7: #{dsconv_forward.3} parent=0 // pred_check_branch
    %13 = sbr.rel (0) target = $region9
  $region8: #{dsconv_forward.3} parent=0 // pred_region
    _
  $region9: #{dsconv_forward.3} parent=0 // pred_fallthru
    _
  %v15 = vld [vmem:[%s0] sm:$0x7]
  %v16 = vld [vmem:[%s1] sm:$0xff]
  %v17 = vld [vmem:[%s1 + $0x8] sm:$0xff]
  %v18 = vld [vmem:[%s1 + $0x10] sm:$0xff]
  %v19 = vld [vmem:[%s1 + $0x18] sm:$0xff]
  %v20 = vld [vmem:[%s1 + $0x20] sm:$0xff]
  %v21 = vld [vmem:[%s1 + $0x28] sm:$0xff]
  %v22 = vld [vmem:[%s1 + $0x30] sm:$0xff]
  %v23 = vld [vmem:[%s1 + $0x38] sm:$0xff]
  %v24 = vld [vmem:[%s1 + $0x40] sm:$0x33]
  %v25 = vld [vmem:[%s1 + $0x48] sm:$0x33]
  %v36 = vunpack.c.l.b16 %v16
  %v37 = vunpack.c.h.b16 %v16
  %v38 = vunpack.c.l.b16 %v17
  %v39 = vunpack.c.h.b16 %v17
  %v40 = vunpack.c.l.b16 %v18
  %v41 = vunpack.c.h.b16 %v18
  %v42 = vunpack.c.l.b16 %v19
  %v43 = vunpack.c.h.b16 %v19
  %v44 = vunpack.c.l.b16 %v20
  %v45 = vunpack.c.h.b16 %v20
  %v46 = vunpack.c.l.b16 %v21
  %v47 = vunpack.c.h.b16 %v21
  %v48 = vunpack.c.l.b16 %v22
  %v49 = vunpack.c.h.b16 %v22
  %v50 = vunpack.c.l.b16 %v23
  %v51 = vunpack.c.h.b16 %v23
  %v52 = vunpack.c.l.b16 %v24
  %v53 = vunpack.c.h.b16 %v24
  %v54 = vunpack.c.l.b16 %v25
  %v55 = vunpack.c.h.b16 %v25
  %v56 = vpack.c.b16 %v40, %v36
  %v57 = vpack.c.b16 %v41, %v37
  %v58 = vpack.c.b16 %v42, %v38
  %v59 = vpack.c.b16 %v43, %v39
  %v60 = vpack.c.b16 %v48, %v44
  %v61 = vpack.c.b16 %v49, %v45
  %v62 = vpack.c.b16 %v50, %v46
  %v63 = vpack.c.b16 %v51, %v47
  %v64 = vpack.c.b16 %v52, %v52
  %v65 = vpack.c.b16 %v53, %v53
  %v66 = vpack.c.b16 %v54, %v54
  %v67 = vpack.c.b16 %v55, %v55
  %vm76 = vcmask 293888
  %v78 = vsel %vm76, %v15, 0
  %vm80 = vcmask 1041408
  %v82 = vsel %vm80, %v64, 0
  %v85 = vsel %vm80, %v65, 0
  %v88 = vsel %vm80, %v66, 0
  %v91 = vsel %vm80, %v67, 0
  %93 = vmatpush.bf16.msra.mxu0 0
  %94 = vmatpush.bf16.msra.mxu0 0
  %95 = vmatpush.bf16.msra.mxu0 0
  %96 = vmatpush.bf16.msra.mxu0 0
  %97 = vmatpush.bf16.msra.mxu0 0
  %98 = vmatpush.bf16.msra.mxu0 %v82
  %99 = vmatpush.bf16.msra.mxu0 %v60
  %100 = vmatpush.bf16.msra.mxu0 %v56
  %101 = vmatmul.bf16.gmra.mxu0 %v78
  %v102 = vpop.f32.mrf.mxu0
  %v103 = vadd.f32 0.0, %v102
  %v104 = vpop.f32.mrf.mxu0
  %105 = vdwg.mxu0
  %106 = vmatpush.bf16.msra.mxu0 0
  %107 = vmatpush.bf16.msra.mxu0 0
  %108 = vmatpush.bf16.msra.mxu0 0
  %109 = vmatpush.bf16.msra.mxu0 0
  %110 = vmatpush.bf16.msra.mxu0 0
  %111 = vmatpush.bf16.msra.mxu0 %v85
  %112 = vmatpush.bf16.msra.mxu0 %v61
  %113 = vmatpush.bf16.msra.mxu0 %v57
  %114 = vmatmul.bf16.gmra.mxu0 %v78
  %v115 = vpop.f32.mrf.mxu0
  %v116 = vadd.f32 0.0, %v115
  %v117 = vpop.f32.mrf.mxu0
  %118 = vdwg.mxu0
  %119 = vmatpush.bf16.msra.mxu0 0
  %120 = vmatpush.bf16.msra.mxu0 0
  %121 = vmatpush.bf16.msra.mxu0 0
  %122 = vmatpush.bf16.msra.mxu0 0
  %123 = vmatpush.bf16.msra.mxu0 0
  %124 = vmatpush.bf16.msra.mxu0 %v88
  %125 = vmatpush.bf16.msra.mxu0 %v62
  %126 = vmatpush.bf16.msra.mxu0 %v58
  %127 = vmatmul.bf16.gmra.mxu0 %v78
  %v128 = vpop.f32.mrf.mxu0
  %v129 = vadd.f32 0.0, %v128
  %v130 = vpop.f32.mrf.mxu0
  %131 = vdwg.mxu0
  %132 = vmatpush.bf16.msra.mxu0 0
  %133 = vmatpush.bf16.msra.mxu0 0
  %134 = vmatpush.bf16.msra.mxu0 0
  %135 = vmatpush.bf16.msra.mxu0 0
  %136 = vmatpush.bf16.msra.mxu0 0
  %137 = vmatpush.bf16.msra.mxu0 %v91
  %138 = vmatpush.bf16.msra.mxu0 %v63
  %139 = vmatpush.bf16.msra.mxu0 %v59
  %140 = vmatmul.bf16.gmra.mxu0 %v78
  %v141 = vpop.f32.mrf.mxu0
  %v142 = vadd.f32 0.0, %v141
  %v143 = vpop.f32.mrf.mxu0
  %144 = vdwg.mxu0
  %v145 = vpack.c.bf16 %v116, %v103
  %v146 = vpack.c.bf16 %v142, %v129
  %147 = vst [vmem:[%s2] sm:$0x77] %v145
  %148 = vst [vmem:[%s2 + $0x8] sm:$0x77] %v146
  %p149 = scmp.eq.s32.totalorder 0, 0
  // Predicated region
  $region10: #{dsconv_forward.3} parent=0 // pred_check
    %p150 = pneg %p149
  $region11: #{dsconv_forward.3} parent=0 // pred_check_branch
    %152 = sbr.rel (%p150) target = $region13
  $region12: #{dsconv_forward.3} parent=0 // pred_region
    %vm153 = vcmask 5120
    %154 = vst.msk [vmem:[%s3] sm:$0x3f] %vm153, 0.0
    %155 = vst.msk [vmem:[%s4] sm:$0x3f] %vm153, 0.0
  $region13: #{dsconv_forward.3} parent=0 // pred_fallthru
    _
  %v156 = vld [vmem:[%s3] sm:$0x3f]
  %vm157 = vcmask 1045504
  %v158 = vsel %vm157, %v103, 0.0
  %v159 = vsel %vm157, %v116, 0.0
  %v160 = vadd.f32 %v158, %v159
  %v161 = vsel %vm157, %v129, 0.0
  %v162 = vadd.f32 %v160, %v161
  %v163 = vsel %vm157, %v142, 0.0
  %v164 = vadd.f32 %v162, %v163
  %165 = vadd.xlane.f32.xlu0 %v164
  %v166 = vpop.xlane.xlu0 %165
  %v167 = vadd.f32 %v156, %v166
  %vm168 = vcmask 5120
  %169 = vst.msk [vmem:[%s3] sm:$0x3f] %vm168, %v167
  %v170 = vld [vmem:[%s4] sm:$0x3f]
  %v171 = vmul.f32 %v103, %v103
  %v172 = vmul.f32 %v116, %v116
  %v173 = vmul.f32 %v129, %v129
  %v174 = vmul.f32 %v142, %v142
  %v175 = vsel %vm157, %v171, 0.0
  %v176 = vsel %vm157, %v172, 0.0
  %v177 = vadd.f32 %v175, %v176
  %v178 = vsel %vm157, %v173, 0.0
  %v179 = vadd.f32 %v177, %v178
  %v180 = vsel %vm157, %v174, 0.0
  %v181 = vadd.f32 %v179, %v180
  %182 = vadd.xlane.f32.xlu0 %v181
  %v183 = vpop.xlane.xlu0 %182
  %v184 = vadd.f32 %v170, %v183
  %185 = vst.msk [vmem:[%s4] sm:$0x3f] %vm168, %v184
  // Predicated region
  $region14: #{dsconv_forward.3} parent=0 // pred_check
    _
  $region15: #{dsconv_forward.3} parent=0 // pred_check_branch
    %187 = sbr.rel (0) target = $region17
  $region16: #{dsconv_forward.3} parent=0 // pred_region
    _
  $region17: #{dsconv_forward.3} parent=0 // pred_fallthru
    _
  // Predicated region
  $region18: #{dsconv_forward.3} parent=0 // pred_check
    _
  $region19: #{dsconv_forward.3} parent=0 // pred_check_branch
    %189 = sbr.rel (0) target = $region21
  $region20: #{dsconv_forward.3} parent=0 // pred_region
    _
  $region21: #{dsconv_forward.3} parent=0 // pred_fallthru
    _
  // Predicated region
  $region22: #{dsconv_forward.3} parent=0 // pred_check
    _
  $region23: #{dsconv_forward.3} parent=0 // pred_check_branch
    %191 = sbr.rel (0) target = $region25
  $region24: #{dsconv_forward.3} parent=0 // pred_region
    _
  $region25: #{dsconv_forward.3} parent=0 // pred_fallthru
    _
  // Predicated region
  $region26: #{dsconv_forward.3} parent=0 // pred_check
    _
  $region27: #{dsconv_forward.3} parent=0 // pred_check_branch
    %193 = sbr.rel (0) target = $region29
  $region28: #{dsconv_forward.3} parent=0 // pred_region
    _
  $region29: #{dsconv_forward.3} parent=0 // pred_fallthru
    _
  // Predicated region
  $region30: #{dsconv_forward.3} parent=0 // pred_check
    _
  $region31: #{dsconv_forward.3} parent=0 // pred_check_branch
    %195 = sbr.rel (0) target = $region33
  $region32: #{dsconv_forward.3} parent=0 // pred_region
    _
  $region33: #{dsconv_forward.3} parent=0 // pred_fallthru
    _
  // Predicated region
  $region34: #{dsconv_forward.3} parent=0 // pred_check
    _
  $region35: #{dsconv_forward.3} parent=0 // pred_check_branch
    %197 = sbr.rel (0) target = $region37
  $region36: #{dsconv_forward.3} parent=0 // pred_region
    _
  $region37: #{dsconv_forward.3} parent=0 // pred_fallthru
    _

// kernel: dsconv_forward.5
$region0: #{dsconv_forward.5}
  #allocation0 [shape = 'u32[]', space=smem, size = 0x4, offset = 0x4, fixed_abs, tag = 'smem constant byte address 0x4 - core index']
  #allocation1 [shape = 'u32[72,128]{1,0:T(1,128)}', space=vmem, size = 0x9000, scoped, tag = 'internal scratch']
  %s0 = inlined_call_operand.vmem [shape: bf16[2,12,256], index: 0, kind: input, shape index: {}]
  %s1 = inlined_call_operand.vmem [shape: bf16[8,12], index: 1, kind: input, shape index: {}]
  %s2 = inlined_call_operand.vmem [shape: f32[8,1], index: 2, kind: input, shape index: {}]
  %s3 = inlined_call_operand.vmem [shape: f32[8,8], index: 3, kind: input, shape index: {}]
  %s4 = inlined_call_operand.vmem [shape: f32[2,8,256], index: 4, kind: output, shape index: {}]
  %s5 = sld [smem:[#allocation0]]
  $region49: #{dsconv_forward.5} parent=0
    _
  %s7 = ssub.s32 1, %s5
  %s8 = scalar_select 0, %s7, %s5
  loop: start=0, step=1, limit=4
  $region2: #{dsconv_forward.5} parent=0 // loop_pre_header
    _
  $region3: #{dsconv_forward.5} parent=0 // loop_header
    %s10 = sphi 0, %s14
    %p11 = scmp.ge.s32.totalorder %s10, 4
    %s20 = sphi 0, %s22
    %s23 = sphi 0, %s20
    %s24 = sphi 0, %s23
    %s40 = sphi 0, %s24
    %s44 = sphi 0, %s44
    %s46 = sphi 0, %s44
    %s47 = sphi 0, %s46
    %s61 = sphi 0, %s47
    %s65 = sphi 0, %s65
    %s67 = sphi 0, %s65
    %s68 = sphi 0, %s67
    %s82 = sphi 0, %s68
    %s86 = sphi 0, %s86
    %s88 = sphi 0, %s86
    %s89 = sphi 0, %s88
    %s103 = sphi 0, %s89
    %s109 = sphi 0, %s111
    %s112 = sphi 0, %s109
    %s113 = sphi 0, %s112
    %s129 = sphi 0, %s113
  $region4: #{dsconv_forward.5} parent=0 // loop_header_branch
    %13 = sbr.rel (%p11) target = $region8
  $region5: #{dsconv_forward.5} parent=0 // loop_body
    %s15 = ssub.s32 %s10, 1
    %s16 = ssub.s32 %s10, 2
    %s17 = sadd.s32 %s10, 1
    %s18 = ssub.s32 %s10, %s17
    %p19 = scmp.eq.s32.totalorder %s18, 0
    %s21 = sadd.s32 %s20, 1
    %s22 = scalar_select %p19, %s20, %s21
    %p25 = pneg %p19
    %p26 = scmp.eq.s32.totalorder %s10, 1
    %p27 = por %p25, %p26
    %p28 = scmp.ne.s32.totalorder %s20, %s23
    %p29 = scmp.eq.s32.totalorder %s10, 0
    %p30 = por %p28, %p29
    %p31 = scmp.ne.s32.totalorder %s20, %s23
    %p32 = scmp.eq.s32.totalorder %s15, 1
    %p33 = por %p31, %p32
    %p34 = scmp.ne.s32.totalorder %s23, %s24
    %p35 = scmp.eq.s32.totalorder %s15, 0
    %p36 = por %p34, %p35
    %p37 = scmp.ne.s32.totalorder %s23, %s24
    %p38 = scmp.eq.s32.totalorder %s16, 1
    %p39 = por %p37, %p38
    %p41 = scmp.ne.s32.totalorder %s24, %s40
    %p42 = scmp.eq.s32.totalorder %s16, 0
    %p43 = por %p41, %p42
    %s45 = sadd.s32 %s44, 1
    %p48 = scmp.eq.s32.totalorder %s10, 1
    %p49 = scmp.ne.s32.totalorder %s44, %s46
    %p50 = scmp.eq.s32.totalorder %s10, 0
    %p51 = por %p49, %p50
    %p52 = scmp.ne.s32.totalorder %s44, %s46
    %p53 = scmp.eq.s32.totalorder %s15, 1
    %p54 = por %p52, %p53
    %p55 = scmp.ne.s32.totalorder %s46, %s47
    %p56 = scmp.eq.s32.totalorder %s15, 0
    %p57 = por %p55, %p56
    %p58 = scmp.ne.s32.totalorder %s46, %s47
    %p59 = scmp.eq.s32.totalorder %s16, 1
    %p60 = por %p58, %p59
    %p62 = scmp.ne.s32.totalorder %s47, %s61
    %p63 = scmp.eq.s32.totalorder %s16, 0
    %p64 = por %p62, %p63
    %s66 = sadd.s32 %s65, 1
    %p69 = scmp.eq.s32.totalorder %s10, 1
    %p70 = scmp.ne.s32.totalorder %s65, %s67
    %p71 = scmp.eq.s32.totalorder %s10, 0
    %p72 = por %p70, %p71
    %p73 = scmp.ne.s32.totalorder %s65, %s67
    %p74 = scmp.eq.s32.totalorder %s15, 1
    %p75 = por %p73, %p74
    %p76 = scmp.ne.s32.totalorder %s67, %s68
    %p77 = scmp.eq.s32.totalorder %s15, 0
    %p78 = por %p76, %p77
    %p79 = scmp.ne.s32.totalorder %s67, %s68
    %p80 = scmp.eq.s32.totalorder %s16, 1
    %p81 = por %p79, %p80
    %p83 = scmp.ne.s32.totalorder %s68, %s82
    %p84 = scmp.eq.s32.totalorder %s16, 0
    %p85 = por %p83, %p84
    %s87 = sadd.s32 %s86, 1
    %p90 = scmp.eq.s32.totalorder %s10, 1
    %p91 = scmp.ne.s32.totalorder %s86, %s88
    %p92 = scmp.eq.s32.totalorder %s10, 0
    %p93 = por %p91, %p92
    %p94 = scmp.ne.s32.totalorder %s86, %s88
    %p95 = scmp.eq.s32.totalorder %s15, 1
    %p96 = por %p94, %p95
    %p97 = scmp.ne.s32.totalorder %s88, %s89
    %p98 = scmp.eq.s32.totalorder %s15, 0
    %p99 = por %p97, %p98
    %p100 = scmp.ne.s32.totalorder %s88, %s89
    %p101 = scmp.eq.s32.totalorder %s16, 1
    %p102 = por %p100, %p101
    %p104 = scmp.ne.s32.totalorder %s89, %s103
    %p105 = scmp.eq.s32.totalorder %s16, 0
    %p106 = por %p104, %p105
    %s107 = ssub.s32 %s10, %s17
    %p108 = scmp.eq.s32.totalorder %s107, 0
    %s110 = sadd.s32 %s109, 1
    %s111 = scalar_select %p108, %s109, %s110
    %p114 = pneg %p108
    %p115 = scmp.eq.s32.totalorder %s10, 1
    %p116 = por %p114, %p115
    %p117 = scmp.ne.s32.totalorder %s109, %s112
    %p118 = scmp.eq.s32.totalorder %s10, 0
    %p119 = por %p117, %p118
    %p120 = scmp.ne.s32.totalorder %s109, %s112
    %p121 = scmp.eq.s32.totalorder %s15, 1
    %p122 = por %p120, %p121
    %p123 = scmp.ne.s32.totalorder %s112, %s113
    %p124 = scmp.eq.s32.totalorder %s15, 0
    %p125 = por %p123, %p124
    %p126 = scmp.ne.s32.totalorder %s112, %s113
    %p127 = scmp.eq.s32.totalorder %s16, 1
    %p128 = por %p126, %p127
    %p130 = scmp.ne.s32.totalorder %s113, %s129
    %p131 = scmp.eq.s32.totalorder %s16, 0
    %p132 = por %p130, %p131
    %p133 = scmp.le.s32.totalorder 1, %s10
    %p134 = scmp.lt.s32.totalorder %s10, 3
    %p135 = pnand %p133, %p134
    %p136 = pneg %p135
    // Predicated region
    $region9: #{dsconv_forward.5} parent=5 // pred_check
      _
    $region10: #{dsconv_forward.5} parent=5 // pred_check_branch
      %138 = sbr.rel (%p135) target = $region12
    $region11: #{dsconv_forward.5} parent=5 // pred_region
      %s139 = ssub.s32 %s10, 1
      // Predicated region
      $region13: #{dsconv_forward.5} parent=11 // pred_check
        %p140 = pneg %p57
      $region14: #{dsconv_forward.5} parent=11 // pred_check_branch
        %142 = sbr.rel (%p140) target = $region16
      $region15: #{dsconv_forward.5} parent=11 // pred_region
        _
      $region16: #{dsconv_forward.5} parent=11 // pred_fallthru
        _
      // Predicated region
      $region17: #{dsconv_forward.5} parent=11 // pred_check
        %p143 = pneg %p78
      $region18: #{dsconv_forward.5} parent=11 // pred_check_branch
        %145 = sbr.rel (%p143) target = $region20
      $region19: #{dsconv_forward.5} parent=11 // pred_region
        _
      $region20: #{dsconv_forward.5} parent=11 // pred_fallthru
        _
      // Predicated region
      $region21: #{dsconv_forward.5} parent=11 // pred_check
        %p146 = pneg %p99
      $region22: #{dsconv_forward.5} parent=11 // pred_check_branch
        %148 = sbr.rel (%p146) target = $region24
      $region23: #{dsconv_forward.5} parent=11 // pred_region
        _
      $region24: #{dsconv_forward.5} parent=11 // pred_fallthru
        _
    $region12: #{dsconv_forward.5} parent=5 // pred_fallthru
      _
    %p149 = scmp.lt.s32.totalorder %s10, 2
    // Predicated region
    $region25: #{dsconv_forward.5} parent=5 // pred_check
      %p150 = pneg %p149
    $region26: #{dsconv_forward.5} parent=5 // pred_check_branch
      %152 = sbr.rel (%p150) target = $region28
    $region27: #{dsconv_forward.5} parent=5 // pred_region
      // Predicated region
      $region29: #{dsconv_forward.5} parent=27 // pred_check
        %p153 = pneg %p30
      $region30: #{dsconv_forward.5} parent=27 // pred_check_branch
        %155 = sbr.rel (%p153) target = $region32
      $region31: #{dsconv_forward.5} parent=27 // pred_region
        %p156 = scmp.lt.s32.totalorder %s10, 1
        %s157 = scalar_select %p156, %s10, 1
        %s158 = smul.addr %s157, 4
        %s159 = smul.addr %s158, 4
        %s160 = scalar_lea.vmem %s0, %s159
      $region32: #{dsconv_forward.5} parent=27 // pred_fallthru
        _
    $region28: #{dsconv_forward.5} parent=5 // pred_fallthru
      _
    %p161 = scmp.le.s32.totalorder 1, %s10
    %p162 = scmp.lt.s32.totalorder %s10, 3
    %p163 = pnand %p161, %p162
    %p164 = pneg %p163
    // Predicated region
    $region33: #{dsconv_forward.5} parent=5 // pred_check
      _
    $region34: #{dsconv_forward.5} parent=5 // pred_check_branch
      %166 = sbr.rel (%p163) target = $region36
    $region35: #{dsconv_forward.5} parent=5 // pred_region
      %s167 = ssub.s32 %s10, 1
      %p168 = scmp.lt.s32.totalorder %s15, 1
      %s169 = scalar_select %p168, %s15, 1
      %s170 = smul.addr %s169, 4
      %s171 = smul.addr %s170, 4
      %s172 = scalar_lea.vmem %s0, %s171
      %p173 = pneg %p36
      %p174 = pneg %p33
      %p175 = pneg %p57
      %p176 = pneg %p54
      %p177 = pneg %p78
      %p178 = pneg %p75
      %p179 = pneg %p99
      %p180 = pneg %p96
      %p181 = pneg %p125
      %p182 = pneg %p122
      %p183 = scmp.lt.s32.totalorder %s15, 1
      %s184 = scalar_select %p183, %s15, 1
      %s185 = smul.addr %s184, 2
      %s186 = smul.addr %s185, 8
      %s187 = scalar_lea.vmem %s4, %s186
      %p188 = scmp.lt.s32.totalorder %s15, 1
      %s189 = scalar_select %p188, %s15, 1
      %s190 = smul.addr %s189, 4
      %s191 = smul.addr %s190, 4
      %s192 = scalar_lea.vmem %s0, %s191
      %p193 = scmp.lt.s32.totalorder %s15, 1
      %s194 = scalar_select %p193, %s15, 1
      %s195 = smul.addr %s194, 2
      %s196 = smul.addr %s195, 8
      %s197 = scalar_lea.vmem %s4, %s196
      %v199 = vld [vmem:[%s1] sm:$0xf]
      %v200 = vld [vmem:[%s192] sm:$0xff]
      %v201 = vld [vmem:[%s192 + $0x8] sm:$0x33]
      %v202 = vld [vmem:[%s2] sm:$0xff]
      %204 = vset.pattern.permute.xlu0 0
      %205 = vperm.xlu0 %204, %v202
      %v206 = vpop.permute.xlu0 %205
      %v210 = vunpack.c.l.b16 %v200
      %v211 = vunpack.c.h.b16 %v200
      %v212 = vunpack.c.l.b16 %v201
      %v213 = vunpack.c.h.b16 %v201
      %v214 = vpack.c.b16 %v212, %v210
      %v215 = vpack.c.b16 %v213, %v211
      %vm216 = vcmask 97280
      %v218 = vsel %vm216, %v199, 0
      %vm220 = vcmask 1045504
      %v222 = vsel %vm220, %v214, 0
      %v225 = vsel %vm220, %v215, 0
      %227 = vmatpush.bf16.msra.mxu0 0
      %228 = vmatpush.bf16.msra.mxu0 0
      %229 = vmatpush.bf16.msra.mxu0 0
      %230 = vmatpush.bf16.msra.mxu0 0
      %231 = vmatpush.bf16.msra.mxu0 0
      %232 = vmatpush.bf16.msra.mxu0 0
      %233 = vmatpush.bf16.msra.mxu0 0
      %234 = vmatpush.bf16.msra.mxu0 %v222
      %235 = vmatmul.bf16.gmra.mxu0 %v218
      %v236 = vpop.f32.mrf.mxu0
      %v237 = vadd.f32 %v206, %v236
      %v238 = vpop.f32.mrf.mxu0
      %239 = vdwg.mxu0
      %240 = vmatpush.bf16.msra.mxu0 0
      %241 = vmatpush.bf16.msra.mxu0 0
      %242 = vmatpush.bf16.msra.mxu0 0
      %243 = vmatpush.bf16.msra.mxu0 0
      %244 = vmatpush.bf16.msra.mxu0 0
      %245 = vmatpush.bf16.msra.mxu0 0
      %246 = vmatpush.bf16.msra.mxu0 0
      %247 = vmatpush.bf16.msra.mxu0 %v225
      %248 = vmatmul.bf16.gmra.mxu0 %v218
      %v249 = vpop.f32.mrf.mxu0
      %v250 = vadd.f32 %v206, %v249
      %v251 = vpop.f32.mrf.mxu0
      %252 = vdwg.mxu0
      %v253 = vld [vmem:[%s3] sm:$0xff]
      %vm254 = vcmask 64512
      %v256 = vsel %vm254, %v253, 0
      %258 = vmatpush.msra.mxu0 0.0
      %259 = vmatpush.msra.mxu0 0.0
      %260 = vmatpush.msra.mxu0 0.0
      %261 = vmatpush.msra.mxu0 0.0
      %262 = vmatpush.msra.mxu0 0.0
      %263 = vmatpush.msra.mxu0 0.0
      %264 = vmatpush.msra.mxu0 0.0
      %265 = vmatpush.msra.mxu0 0.0
      %266 = vmatpush.msra.mxu0 0.0
      %267 = vmatpush.msra.mxu0 0.0
      %268 = vmatpush.msra.mxu0 0.0
      %269 = vmatpush.msra.mxu0 0.0
      %270 = vmatpush.msra.mxu0 0.0
      %271 = vmatpush.msra.mxu0 0.0
      %272 = vmatpush.msra.mxu0 0.0
      %273 = vmatpush.msra.mxu0 %v237
      %274 = vmatmul.f32.gmra.mxu0 %v256
      %v275 = vpop.f32.mrf.mxu0
      %v276 = vadd.f32 0.0, %v275
      %277 = vdwg.mxu0
      %278 = vmatpush.msra.mxu0 0.0
      %279 = vmatpush.msra.mxu0 0.0
      %280 = vmatpush.msra.mxu0 0.0
      %281 = vmatpush.msra.mxu0 0.0
      %282 = vmatpush.msra.mxu0 0.0
      %283 = vmatpush.msra.mxu0 0.0
      %284 = vmatpush.msra.mxu0 0.0
      %285 = vmatpush.msra.mxu0 0.0
      %286 = vmatpush.msra.mxu0 0.0
      %287 = vmatpush.msra.mxu0 0.0
      %288 = vmatpush.msra.mxu0 0.0
      %289 = vmatpush.msra.mxu0 0.0
      %290 = vmatpush.msra.mxu0 0.0
      %291 = vmatpush.msra.mxu0 0.0
      %292 = vmatpush.msra.mxu0 0.0
      %293 = vmatpush.msra.mxu0 %v250
      %294 = vmatmul.f32.gmra.mxu0 %v256
      %v295 = vpop.f32.mrf.mxu0
      %v296 = vadd.f32 0.0, %v295
      %297 = vdwg.mxu0
      %v298 = vmul.f32 %v237, %v237
      %v299 = vmul.f32 %v250, %v250
      %300 = vmatpush.msra.mxu0 0.0
      %301 = vmatpush.msra.mxu0 0.0
      %302 = vmatpush.msra.mxu0 0.0
      %303 = vmatpush.msra.mxu0 0.0
      %304 = vmatpush.msra.mxu0 0.0
      %305 = vmatpush.msra.mxu0 0.0
      %306 = vmatpush.msra.mxu0 0.0
      %307 = vmatpush.msra.mxu0 0.0
      %308 = vmatpush.msra.mxu0 0.0
      %309 = vmatpush.msra.mxu0 0.0
      %310 = vmatpush.msra.mxu0 0.0
      %311 = vmatpush.msra.mxu0 0.0
      %312 = vmatpush.msra.mxu0 0.0
      %313 = vmatpush.msra.mxu0 0.0
      %314 = vmatpush.msra.mxu0 0.0
      %315 = vmatpush.msra.mxu0 %v298
      %316 = vmatmul.f32.gmra.mxu0 %v256
      %v317 = vpop.f32.mrf.mxu0
      %v318 = vadd.f32 0.0, %v317
      %319 = vdwg.mxu0
      %320 = vmatpush.msra.mxu0 0.0
      %321 = vmatpush.msra.mxu0 0.0
      %322 = vmatpush.msra.mxu0 0.0
      %323 = vmatpush.msra.mxu0 0.0
      %324 = vmatpush.msra.mxu0 0.0
      %325 = vmatpush.msra.mxu0 0.0
      %326 = vmatpush.msra.mxu0 0.0
      %327 = vmatpush.msra.mxu0 0.0
      %328 = vmatpush.msra.mxu0 0.0
      %329 = vmatpush.msra.mxu0 0.0
      %330 = vmatpush.msra.mxu0 0.0
      %331 = vmatpush.msra.mxu0 0.0
      %332 = vmatpush.msra.mxu0 0.0
      %333 = vmatpush.msra.mxu0 0.0
      %334 = vmatpush.msra.mxu0 0.0
      %335 = vmatpush.msra.mxu0 %v299
      %336 = vmatmul.f32.gmra.mxu0 %v256
      %v337 = vpop.f32.mrf.mxu0
      %v338 = vadd.f32 0.0, %v337
      %339 = vdwg.mxu0
      %v340 = vadd.f32 %v276, %v296
      %341 = vadd.xlane.f32.xlu0 %v340
      %v342 = vpop.xlane.xlu0 %341
      %v343 = vmul.f32 %v342, 0.0009765625
      %v344 = vadd.f32 %v318, %v338
      %345 = vadd.xlane.f32.xlu0 %v344
      %v346 = vpop.xlane.xlu0 %345
      %v347 = vmul.f32 %v346, 0.0009765625
      %v348 = vmul.f32 %v343, %v343
      %v349 = vsub.f32 %v347, %v348
      %v350 = vmax.f32 %v349, 0.0
      %v351 = vsub.f32 %v237, %v343
      %v352 = vsub.f32 %v250, %v343
      %v353 = vadd.f32 %v350, 1e-05
      %v354 = vrsqrt.pop %v353
      %v355 = vmul.f32 %v354, %v353
      %v356 = vmul.f32 %v355, %v354
      %v357 = vmul.f32 0.5, %v356
      %v358 = vsub.f32 1.5, %v357
      %v359 = vmul.f32 %v354, %v358
      %vm360 = vweird.f32 %v353
      %vm361 = vweird.f32 %v354
      %vm362 = vmor %vm360, %vm361
      %v363 = vsel %vm362, %v354, %v359
      %v364 = vmul.f32 %v351, %v363
      %v365 = vmul.f32 %v352, %v363
      %v366 = vmax.f32 %v364, 0.0
      %v367 = vmax.f32 %v365, 0.0
      %368 = vst [vmem:[%s197] sm:$0xff] %v366
      %369 = vst [vmem:[%s197 + $0x8] sm:$0xff] %v367
      %p370 = scmp.lt.s32.totalorder %s15, 1
      %s371 = scalar_select %p370, %s15, 1
      %s372 = smul.addr %s371, 2
      %s373 = smul.addr %s372, 8
      %s374 = scalar_lea.vmem %s4, %s373
      // Predicated region
      $region37: #{dsconv_forward.5} parent=35 // pred_check
        %p375 = pneg %p122
      $region38: #{dsconv_forward.5} parent=35 // pred_check_branch
        %377 = sbr.rel (%p375) target = $region40
      $region39: #{dsconv_forward.5} parent=35 // pred_region
        _
      $region40: #{dsconv_forward.5} parent=35 // pred_fallthru
        _
    $region36: #{dsconv_forward.5} parent=5 // pred_fallthru
      _
    %p378 = scmp.le.s32.totalorder 2, %s10
    // Predicated region
    $region41: #{dsconv_forward.5} parent=5 // pred_check
      %p379 = pneg %p378
    $region42: #{dsconv_forward.5} parent=5 // pred_check_branch
      %381 = sbr.rel (%p379) target = $region44
    $region43: #{dsconv_forward.5} parent=5 // pred_region
      %s382 = ssub.s32 %s10, 2
      // Predicated region
      $region45: #{dsconv_forward.5} parent=43 // pred_check
        %p383 = pneg %p128
      $region46: #{dsconv_forward.5} parent=43 // pred_check_branch
        %385 = sbr.rel (%p383) target = $region48
      $region47: #{dsconv_forward.5} parent=43 // pred_region
        %p386 = scmp.lt.s32.totalorder %s16, 1
        %s387 = scalar_select %p386, %s16, 1
        %s388 = smul.addr %s387, 2
        %s389 = smul.addr %s388, 8
        %s390 = scalar_lea.vmem %s4, %s389
      $region48: #{dsconv_forward.5} parent=43 // pred_fallthru
        _
    $region44: #{dsconv_forward.5} parent=5 // pred_fallthru
      _
  $region6: #{dsconv_forward.5} parent=0 // loop_footer
    %s14 = sadd.s32 1, %s10
  $region7: #{dsconv_forward.5} parent=0 // loop_footer_branch
    %9 = sbr.rel target = $region3
  $region8: #{dsconv_forward.5} parent=0 // loop_exit
    _

</llo_original>
